<compile_context>
chip_gen: v5e
topology: v5e:2x2
jax: 0.10.0
libtpu: 0.0.40
codegen_flags: <defaults>
</compile_context>

<pallas_src>
import jax
import jax.numpy as jnp
from jax.experimental import pallas as pl
from jax.experimental.pallas import tpu as pltpu


def _conv1x1_bias_relu_kernel(x_ref, w_ref, b_ref, o_ref):
    # x_ref: (Cin, THW) f32 (cast to compute dtype in-kernel),
    # w_ref: (Cout, Cin) bf16 with BN scale pre-folded,
    # b_ref: (Cout, 1) f32, o_ref: (Cout, THW) (bf16 by default).
    x = x_ref[...].astype(w_ref.dtype)
    acc = jnp.dot(w_ref[...], x, preferred_element_type=jnp.float32)  # (Cout, THW)
    y = acc + b_ref[...]                                              # lane broadcast
    o_ref[...] = jnp.maximum(y, 0.0).astype(o_ref.dtype)


def conv1x1_bn_relu(x_nchw, conv_w, bn_gamma, bn_beta, bn_mean, bn_var,
                    eps=1e-3, max_tile_hw=8192, compute_dtype=jnp.bfloat16,
                    out_dtype=jnp.bfloat16):
    """Fused 1x1 Conv2d (bias=False) + BatchNorm2d (eval) + ReLU via Pallas."""
    B, Cin, H, W = x_nchw.shape
    Cout = conv_w.shape[0]
    assert conv_w.shape == (Cout, Cin, 1, 1)

    # Fold eval-mode BN into (scale, bias); fold scale into the weights so only
    # a bias-add + ReLU remains in the kernel epilogue.
    scale = bn_gamma / jnp.sqrt(bn_var + eps)                     # (Cout,)
    bias = (bn_beta - bn_mean * scale).astype(jnp.float32)        # (Cout,)
    w = (conv_w.reshape(Cout, Cin) * scale[:, None]).astype(compute_dtype)

    HW = H * W
    x = x_nchw.reshape(B, Cin, HW)            # no cast, no pad — handled in-kernel

    # Lane-dense spatial tile.  Either the tile equals the full HW (valid even
    # if HW % 128 != 0) or it is a multiple of 128 and the ragged last block is
    # masked by Pallas partial-block handling.
    thw = min(max_tile_hw, HW)
    if thw != HW:
        thw = max((thw // 128) * 128, 128)
    # Megacore guard (v7x: 2 TensorCores sharded over "parallel" grid axes):
    # keep >= 2 grid steps even when B == 1.
    if B * pl.cdiv(HW, thw) < 2 and HW > 256:
        thw = pl.cdiv(pl.cdiv(HW, 2), 128) * 128
    n_t = pl.cdiv(HW, thw)

    # VMEM budget: double-buffered in/out tiles + in-kernel bf16 copy + f32 acc
    # + resident weights/bias.  Explicit limit so v5e's 16 MiB scoped default
    # does not bite; capped at 64 MiB for v7x's physical VMEM.
    vmem_bytes = (2 * Cin * thw * x.dtype.itemsize
                  + 2 * Cout * thw * jnp.dtype(out_dtype).itemsize
                  + Cin * thw * jnp.dtype(compute_dtype).itemsize
                  + Cout * thw * 4
                  + 2 * (Cout * Cin * jnp.dtype(compute_dtype).itemsize + Cout * 4))
    vmem_limit = min(max(2 * vmem_bytes + (8 << 20), 32 << 20), 64 << 20)

    out = pl.pallas_call(
        _conv1x1_bias_relu_kernel,
        out_shape=jax.ShapeDtypeStruct((B, Cout, HW), out_dtype),
        grid_spec=pl.GridSpec(
            grid=(B, n_t),
            in_specs=[
                # batch dim squeezed out of the kernel view.
                pl.BlockSpec((None, Cin, thw), lambda b, t: (b, 0, t)),
                pl.BlockSpec((Cout, Cin), lambda b, t: (0, 0)),   # resident
                pl.BlockSpec((Cout, 1), lambda b, t: (0, 0)),     # resident
            ],
            out_specs=pl.BlockSpec((None, Cout, thw), lambda b, t: (b, 0, t)),
        ),
        compiler_params=pltpu.CompilerParams(
            dimension_semantics=("parallel", "parallel"),
            vmem_limit_bytes=int(vmem_limit)),
    )(x, w, bias[:, None])

    return out.reshape(B, Cout, H, W)


class Conv2DCollapseWPillar:
    """JAX port of pcdet Conv2DCollapse_w_pillar (deterministic synthetic params)."""

    def __init__(self, num_bev_features, grid_size, pl_only=False, key=None,
                 conv_out_dtype=jnp.bfloat16):
        self.num_heights = grid_size[-1]
        self.num_bev_features = num_bev_features
        self.nx, self.ny, _ = grid_size
        self.nz = 1
        self.pl_only = pl_only
        self.conv_out_dtype = conv_out_dtype   # bf16 halves output HBM traffic

        cin = num_bev_features * self.num_heights
        cout = num_bev_features
        k1, k2, k3 = jax.random.split(key, 3)
        self.conv_w = 0.05 * jax.random.normal(k1, (cout, cin, 1, 1), jnp.float32)
        self.bn_gamma = 1.0 + 0.1 * jax.random.normal(k2, (cout,), jnp.float32)
        self.bn_beta = 0.1 * jax.random.normal(k3, (cout,), jnp.float32)
        self.bn_mean = jnp.zeros((cout,), jnp.float32)
        self.bn_var = jnp.ones((cout,), jnp.float32)

    def forward(self, batch_dict, batch_size=None):
        pillar_features = batch_dict['pillar_features']    # (N, C)
        coords = batch_dict['voxel_coords']                 # (N, 4) int32 (b, z, y, x)
        if batch_size is None:
            # Fallback only; forces a device sync. Prefer passing it statically.
            batch_size = int(jnp.max(coords[:, 0])) + 1
        P = self.nz * self.nx * self.ny
        C = self.num_bev_features

        # Pillar scatter, deposited directly into the channel-first (B, C, P)
        # layout (avoids the materialized (B,P,C)->(B,C,P) transpose pass).
        # Duplicate coordinates pick a nondeterministic winner — same as the
        # PyTorch scatter semantics.
        # TODO(synk): data-dependent scatter stays in plain JAX (a Pallas
        # equivalent needs a manual-DMA scatter kernel on the coords).
        sp_idx = coords[:, 1] + coords[:, 2] * self.nx + coords[:, 3]
        buf = jnp.zeros((batch_size, C, P), pillar_features.dtype)
        buf = buf.at[coords[:, 0], :, sp_idx].set(pillar_features, mode='drop')
        batch_spatial_features = buf.reshape(
            batch_size, C * self.nz, self.ny, self.nx)

        if not self.pl_only:
            batch_dict['pillar_spatial_features'] = batch_spatial_features
            voxel_features = batch_dict['voxel_features']  # (B, C, Z, Y, X)
            B, Cv, Z, Y, X = voxel_features.shape
            bev_features = voxel_features.reshape(B, Cv * Z, Y, X)  # flatten(1, 2)
            bev_features = conv1x1_bn_relu(
                bev_features, self.conv_w, self.bn_gamma, self.bn_beta,
                self.bn_mean, self.bn_var, out_dtype=self.conv_out_dtype)
            batch_dict['spatial_features'] = bev_features
        else:
            batch_dict['spatial_features'] = batch_spatial_features
        return batch_dict


def _reference_block_f32(x_nchw, conv_w, gamma, beta, mean, var, eps=1e-3):
    # Pure-JAX f32 reference of BasicBlock2D (1x1 conv + eval BN + ReLU).
    Cout = conv_w.shape[0]
    Cin = conv_w.shape[1]
    w2d = conv_w.reshape(Cout, Cin)
    y = jnp.einsum('bchw,oc->bohw', x_nchw, w2d)
    scale = gamma / jnp.sqrt(var + eps)
    bias = beta - mean * scale
    y = y * scale[None, :, None, None] + bias[None, :, None, None]
    return jnp.maximum(y, 0.0)


def _reference_block_bf16(x_nchw, conv_w, gamma, beta, mean, var, eps=1e-3):
    # Matches the kernel's numerics: bf16 inputs/weights, f32 accumulate.
    Cout = conv_w.shape[0]
    Cin = conv_w.shape[1]
    scale = gamma / jnp.sqrt(var + eps)
    bias = beta - mean * scale
    w = (conv_w.reshape(Cout, Cin) * scale[:, None]).astype(jnp.bfloat16)
    xb = x_nchw.astype(jnp.bfloat16)
    y = jnp.einsum('bchw,oc->bohw', xb, w,
                   preferred_element_type=jnp.float32)
    y = y + bias[None, :, None, None]
    return jnp.maximum(y, 0.0)


if __name__ == "__main__":
    key = jax.random.PRNGKey(0)
    k_params, k_vox, k_pil, k_perm = jax.random.split(key, 4)

    # Small shapes consistent with the module:
    #   grid_size = (X, Y, Z), NUM_BEV_FEATURES = C
    B, C, Z, Y, X = 2, 32, 2, 16, 16
    grid_size = (X, Y, Z)

    module = Conv2DCollapseWPillar(num_bev_features=C, grid_size=grid_size,
                                   pl_only=False, key=k_params)

    voxel_features = jax.random.normal(k_vox, (B, C, Z, Y, X), jnp.float32)

    # Synthetic pillar features + coords in pcdet ordering (batch, z, y, x),
    # unique spatial indices per batch so scatter semantics match PyTorch.
    n_per_batch = 64
    N = B * n_per_batch
    pillar_features = jax.random.normal(k_pil, (N, C), jnp.float32)
    coords_list = []
    for b in range(B):
        flat = jax.random.permutation(jax.random.fold_in(k_perm, b),
                                      module.nx * module.ny)[:n_per_batch]
        y_c = flat // module.nx
        x_c = flat % module.nx
        z_c = jnp.zeros_like(x_c)
        cb = jnp.stack([jnp.full_like(x_c, b), z_c, y_c, x_c], axis=1)
        coords_list.append(cb)
    coords = jnp.concatenate(coords_list, 0).astype(jnp.int32)

    batch_dict = {
        'pillar_features': pillar_features,
        'voxel_coords': coords,
        'voxel_features': voxel_features,
    }

    out = module.forward(batch_dict, batch_size=B)
    spatial = jax.block_until_ready(out['spatial_features'])
    pillar_spatial = jax.block_until_ready(out['pillar_spatial_features'])

    assert spatial.shape == (B, C, Y, X)
    assert spatial.dtype == jnp.bfloat16
    assert pillar_spatial.shape == (B, C * 1, Y, X)

    # --- Correctness: Pallas hot path (bf16 output tolerance) ---
    spatial_f32 = spatial.astype(jnp.float32)
    bev_in = voxel_features.reshape(B, C * Z, Y, X)
    ref_bf16 = _reference_block_bf16(bev_in, module.conv_w, module.bn_gamma,
                                     module.bn_beta, module.bn_mean, module.bn_var)
    assert jnp.allclose(spatial_f32, ref_bf16, atol=2e-2, rtol=2e-2), \
        "mismatch vs bf16-matched reference"
    ref_f32 = _reference_block_f32(bev_in, module.conv_w, module.bn_gamma,
                                   module.bn_beta, module.bn_mean, module.bn_var)
    assert jnp.allclose(spatial_f32, ref_f32, atol=6e-2, rtol=6e-2), \
        "mismatch vs f32 reference"

    # --- Correctness: pillar scatter vs PyTorch-style per-batch loop ---
    ref_spatial = []
    for b in range(B):
        sf = jnp.zeros((C, module.nz * module.nx * module.ny), pillar_features.dtype)
        mask = coords[:, 0] == b
        idx_b = coords[:, 1] + coords[:, 2] * module.nx + coords[:, 3]
        idx_b = jnp.where(mask, idx_b, module.nz * module.nx * module.ny)
        sf = sf.T.at[idx_b].set(pillar_features, mode='drop').T
        ref_spatial.append(sf)
    ref_spatial = jnp.stack(ref_spatial, 0).reshape(B, C, module.ny, module.nx)
    assert jnp.allclose(pillar_spatial, ref_spatial), "pillar scatter mismatch"

    print("KERNEL_OK")
</pallas_src>

<mosaic_0001>
module attributes {stable_mosaic.version = 11 : i64} {
  func.func @_conv1x1_bias_relu_kernel(%arg0: i32, %arg1: i32, %arg2: memref<1x64x256xf32, #tpu.memory_space<vmem>>, %arg3: memref<32x64xbf16, #tpu.memory_space<vmem>>, %arg4: memref<32x1xf32, #tpu.memory_space<vmem>>, %arg5: memref<1x32x256xbf16, #tpu.memory_space<vmem>>) attributes {dimension_semantics = [#tpu.dimension_semantics<parallel>, #tpu.dimension_semantics<parallel>], iteration_bounds = array<i64: 2, 1>, scalar_prefetch = 0 : i64, scratch_operands = 0 : i64, tpu.core_type = #tpu.core_type<tc>, window_params = [{transform_indices = @transform_0, window_bounds = array<i64: 1, 64, 256>}, {pipeline_mode = #tpu.pipeline_mode<synchronous>, transform_indices = @transform_1, window_bounds = array<i64: 32, 64>}, {pipeline_mode = #tpu.pipeline_mode<synchronous>, transform_indices = @transform_2, window_bounds = array<i64: 32, 1>}, {transform_indices = @transform_3, window_bounds = array<i64: 1, 32, 256>}]} {
    %c0 = arith.constant 0 : index
    %c0_0 = arith.constant 0 : index
    %c0_1 = arith.constant 0 : index
    %0 = vector.load %arg2[%c0, %c0_0, %c0_1] : memref<1x64x256xf32, #tpu.memory_space<vmem>>, vector<1x64x256xf32>
    %1 = vector.shape_cast %0 : vector<1x64x256xf32> to vector<64x256xf32>
    %2 = arith.truncf %1 : vector<64x256xf32> to vector<64x256xbf16>
    %c0_2 = arith.constant 0 : index
    %c0_3 = arith.constant 0 : index
    %3 = vector.load %arg3[%c0_2, %c0_3] : memref<32x64xbf16, #tpu.memory_space<vmem>>, vector<32x64xbf16>
    %cst = arith.constant dense<0.000000e+00> : vector<32x256xf32>
    %4 = tpu.matmul %3, %2, %cst {dimension_numbers = #tpu.dot_dimension_numbers<[1], [0], [0], [1], [0, 0, 1, 1], [], []>} : vector<32x64xbf16>, vector<64x256xbf16>, vector<32x256xf32> -> vector<32x256xf32>
    %c0_4 = arith.constant 0 : index
    %c0_5 = arith.constant 0 : index
    %5 = vector.load %arg4[%c0_4, %c0_5] : memref<32x1xf32, #tpu.memory_space<vmem>>, vector<32x1xf32>
    %6 = vector.broadcast %5 : vector<32x1xf32> to vector<32x256xf32>
    %7 = arith.addf %4, %6 : vector<32x256xf32>
    %cst_6 = arith.constant 0.000000e+00 : f32
    %8 = vector.broadcast %cst_6 : f32 to vector<32x256xf32>
    %9 = arith.maximumf %7, %8 : vector<32x256xf32>
    %10 = arith.truncf %9 : vector<32x256xf32> to vector<32x256xbf16>
    %c0_7 = arith.constant 0 : index
    %c0_8 = arith.constant 0 : index
    %c0_9 = arith.constant 0 : index
    %11 = vector.load %arg5[%c0_7, %c0_8, %c0_9] : memref<1x32x256xbf16, #tpu.memory_space<vmem>>, vector<1x32x256xbf16>
    %12 = vector.shape_cast %11 : vector<1x32x256xbf16> to vector<32x256xbf16>
    %13 = vector.shape_cast %10 : vector<32x256xbf16> to vector<1x32x256xbf16>
    tpu.vector_store %arg5[%c0_7, %c0_8, %c0_9], %13 {strides = array<i32>} : memref<1x32x256xbf16, #tpu.memory_space<vmem>>, vector<1x32x256xbf16>,
    return
  }
  func.func @transform_0(%arg0: i32, %arg1: i32) -> (i32, i32, i32) {
    %c0_i32 = arith.constant 0 : i32
    %c0_i32_0 = arith.constant 0 : i32
    return %arg0, %c0_i32, %arg1 : i32, i32, i32
  }
  func.func @transform_1(%arg0: i32, %arg1: i32) -> (i32, i32) {
    %c0_i32 = arith.constant 0 : i32
    %c0_i32_0 = arith.constant 0 : i32
    %c0_i32_1 = arith.constant 0 : i32
    return %c0_i32, %c0_i32_0 : i32, i32
  }
  func.func @transform_2(%arg0: i32, %arg1: i32) -> (i32, i32) {
    %c0_i32 = arith.constant 0 : i32
    %c0_i32_0 = arith.constant 0 : i32
    %c0_i32_1 = arith.constant 0 : i32
    return %c0_i32, %c0_i32_0 : i32, i32
  }
  func.func @transform_3(%arg0: i32, %arg1: i32) -> (i32, i32, i32) {
    %c0_i32 = arith.constant 0 : i32
    %c0_i32_0 = arith.constant 0 : i32
    return %arg0, %c0_i32, %arg1 : i32, i32, i32
  }
}

</mosaic_0001>

<llo_original>
// kernel: tpu_custom_call.1
$region0: #{tpu_custom_call.1}
  #allocation0 [shape = 'u32[]', space=smem, size = 0x4, offset = 0x4, fixed_abs, tag = 'smem constant byte address 0x4 - core index']
  #allocation1 [shape = 'u32[72,128]{1,0:T(1,128)}', space=vmem, size = 0x9000, scoped, tag = 'internal scratch']
  %s0 = inlined_call_operand.hbm [shape: f32[2,64,256], index: 0, kind: input, shape index: {}]
  %s1 = inlined_call_operand.vmem [shape: bf16[32,64], index: 1, kind: input, shape index: {}]
  %s2 = inlined_call_operand.vmem [shape: f32[32,1], index: 2, kind: input, shape index: {}]
  %s3 = inlined_call_operand.hbm [shape: bf16[2,32,256], index: 3, kind: output, shape index: {}]
  %s4 = sld [smem:[#allocation0]]
  $region49: #{tpu_custom_call.1} parent=0
    _
  %s6 = ssub.s32 1, %s4
  %s7 = scalar_select 0, %s6, %s4
  $region1: #{tpu_custom_call.1} parent=0
    #allocation2 [shape = 'u8[131072]{0}', space=vmem, size = 0x20000, scoped, tag = 'input window, operand 0']
    #allocation3 [shape = 's32[2]{0}', space=sflag, size = 0x8, scoped, tag = 'scoped memory for tpu_custom_call.1']
    #allocation4 [shape = 's32[2]{0}', space=sflag, size = 0x8, scoped, tag = 'scoped memory for tpu_custom_call.1']
    #allocation5 [shape = 'u8[32768]{0}', space=vmem, size = 0x8000, scoped, tag = 'output window, operand 0']
    %8 = vsyncpa [#allocation3], 0
    %s9 = scalar_lea.sflag [#allocation3], 1
    %10 = vsyncpa %s9, 0
    %11 = vsyncpa [#allocation4], 0
    %s12 = scalar_lea.sflag [#allocation4], 1
    %13 = vsyncpa %s12, 0
    loop: start=0, step=1, limit=4
    $region2: #{tpu_custom_call.1} parent=1 // loop_pre_header
      _
    $region3: #{tpu_custom_call.1} parent=1 // loop_header
      %s15 = sphi 0, %s19
      %p16 = scmp.ge.s32.totalorder %s15, 4
      %s22 = sphi 0, %s34
      %s23 = sphi 0, %s30
      %s24 = sphi 0, %s22
      %s25 = sphi 0, %s23
      %s26 = sphi 0, %s24
      %s27 = sphi 0, %s25
      %s39 = sphi 0, %s41
      %s42 = sphi 0, %s39
      %s43 = sphi 0, %s42
      %s59 = sphi 0, %s43
      %s63 = sphi 0, %s63
      %s65 = sphi 0, %s63
      %s66 = sphi 0, %s65
      %s80 = sphi 0, %s66
      %s84 = sphi 0, %s84
      %s86 = sphi 0, %s84
      %s87 = sphi 0, %s86
      %s101 = sphi 0, %s87
      %s109 = sphi 0, %s111
      %s112 = sphi 0, %s109
      %s113 = sphi 0, %s112
      %s129 = sphi 0, %s113
    $region4: #{tpu_custom_call.1} parent=1 // loop_header_branch
      %18 = sbr.rel (%p16) target = $region8
    $region5: #{tpu_custom_call.1} parent=1 // loop_body
      %s20 = ssub.s32 %s15, 1
      %s21 = ssub.s32 %s15, 2
      %s28 = sadd.s32 1, %s23
      %p29 = scmp.ge.s32.totalorder %s28, 1
      %s30 = scalar_select %p29, 0, %s28
      %s31 = sadd.s32 1, %s22
      %s32 = scalar_select %p29, %s31, %s22
      %p33 = scmp.ge.s32.totalorder %s32, 2
      %s34 = scalar_select %p33, 0, %s32
      %s35 = ssub.s32 %s22, %s34
      %s36 = ssub.s32 %s23, %s30
      %s37 = sor.u32 %s35, %s36
      %p38 = scmp.eq.s32.totalorder %s37, 0
      %s40 = sadd.s32 %s39, 1
      %s41 = scalar_select %p38, %s39, %s40
      %p44 = pneg %p38
      %p45 = scmp.eq.s32.totalorder %s15, 1
      %p46 = por %p44, %p45
      %p47 = scmp.ne.s32.totalorder %s39, %s42
      %p48 = scmp.eq.s32.totalorder %s15, 0
      %p49 = por %p47, %p48
      %p50 = scmp.ne.s32.totalorder %s39, %s42
      %p51 = scmp.eq.s32.totalorder %s20, 1
      %p52 = por %p50, %p51
      %p53 = scmp.ne.s32.totalorder %s42, %s43
      %p54 = scmp.eq.s32.totalorder %s20, 0
      %p55 = por %p53, %p54
      %p56 = scmp.ne.s32.totalorder %s42, %s43
      %p57 = scmp.eq.s32.totalorder %s21, 1
      %p58 = por %p56, %p57
      %p60 = scmp.ne.s32.totalorder %s43, %s59
      %p61 = scmp.eq.s32.totalorder %s21, 0
      %p62 = por %p60, %p61
      %s64 = sadd.s32 %s63, 1
      %p67 = scmp.eq.s32.totalorder %s15, 1
      %p68 = scmp.ne.s32.totalorder %s63, %s65
      %p69 = scmp.eq.s32.totalorder %s15, 0
      %p70 = por %p68, %p69
      %p71 = scmp.ne.s32.totalorder %s63, %s65
      %p72 = scmp.eq.s32.totalorder %s20, 1
      %p73 = por %p71, %p72
      %p74 = scmp.ne.s32.totalorder %s65, %s66
      %p75 = scmp.eq.s32.totalorder %s20, 0
      %p76 = por %p74, %p75
      %p77 = scmp.ne.s32.totalorder %s65, %s66
      %p78 = scmp.eq.s32.totalorder %s21, 1
      %p79 = por %p77, %p78
      %p81 = scmp.ne.s32.totalorder %s66, %s80
      %p82 = scmp.eq.s32.totalorder %s21, 0
      %p83 = por %p81, %p82
      %s85 = sadd.s32 %s84, 1
      %p88 = scmp.eq.s32.totalorder %s15, 1
      %p89 = scmp.ne.s32.totalorder %s84, %s86
      %p90 = scmp.eq.s32.totalorder %s15, 0
      %p91 = por %p89, %p90
      %p92 = scmp.ne.s32.totalorder %s84, %s86
      %p93 = scmp.eq.s32.totalorder %s20, 1
      %p94 = por %p92, %p93
      %p95 = scmp.ne.s32.totalorder %s86, %s87
      %p96 = scmp.eq.s32.totalorder %s20, 0
      %p97 = por %p95, %p96
      %p98 = scmp.ne.s32.totalorder %s86, %s87
      %p99 = scmp.eq.s32.totalorder %s21, 1
      %p100 = por %p98, %p99
      %p102 = scmp.ne.s32.totalorder %s87, %s101
      %p103 = scmp.eq.s32.totalorder %s21, 0
      %p104 = por %p102, %p103
      %s105 = ssub.s32 %s22, %s34
      %s106 = ssub.s32 %s23, %s30
      %s107 = sor.u32 %s105, %s106
      %p108 = scmp.eq.s32.totalorder %s107, 0
      %s110 = sadd.s32 %s109, 1
      %s111 = scalar_select %p108, %s109, %s110
      %p114 = pneg %p108
      %p115 = scmp.eq.s32.totalorder %s15, 1
      %p116 = por %p114, %p115
      %p117 = scmp.ne.s32.totalorder %s109, %s112
      %p118 = scmp.eq.s32.totalorder %s15, 0
      %p119 = por %p117, %p118
      %p120 = scmp.ne.s32.totalorder %s109, %s112
      %p121 = scmp.eq.s32.totalorder %s20, 1
      %p122 = por %p120, %p121
      %p123 = scmp.ne.s32.totalorder %s112, %s113
      %p124 = scmp.eq.s32.totalorder %s20, 0
      %p125 = por %p123, %p124
      %p126 = scmp.ne.s32.totalorder %s112, %s113
      %p127 = scmp.eq.s32.totalorder %s21, 1
      %p128 = por %p126, %p127
      %p130 = scmp.ne.s32.totalorder %s113, %s129
      %p131 = scmp.eq.s32.totalorder %s21, 0
      %p132 = por %p130, %p131
      %p133 = scmp.le.s32.totalorder 1, %s15
      %p134 = scmp.lt.s32.totalorder %s15, 3
      %p135 = pnand %p133, %p134
      %p136 = pneg %p135
      // Predicated region
      $region9: #{tpu_custom_call.1} parent=5 // pred_check
        _
      $region10: #{tpu_custom_call.1} parent=5 // pred_check_branch
        %138 = sbr.rel (%p135) target = $region12
      $region11: #{tpu_custom_call.1} parent=5 // pred_region
        %s139 = ssub.s32 %s15, 1
        // Predicated region
        $region13: #{tpu_custom_call.1} parent=11 // pred_check
          %p140 = pneg %p76
        $region14: #{tpu_custom_call.1} parent=11 // pred_check_branch
          %142 = sbr.rel (%p140) target = $region16
        $region15: #{tpu_custom_call.1} parent=11 // pred_region
          _
        $region16: #{tpu_custom_call.1} parent=11 // pred_fallthru
          _
        // Predicated region
        $region17: #{tpu_custom_call.1} parent=11 // pred_check
          %p143 = pneg %p97
        $region18: #{tpu_custom_call.1} parent=11 // pred_check_branch
          %145 = sbr.rel (%p143) target = $region20
        $region19: #{tpu_custom_call.1} parent=11 // pred_region
          _
        $region20: #{tpu_custom_call.1} parent=11 // pred_fallthru
          _
      $region12: #{tpu_custom_call.1} parent=5 // pred_fallthru
        _
      %p146 = scmp.lt.s32.totalorder %s15, 2
      // Predicated region
      $region21: #{tpu_custom_call.1} parent=5 // pred_check
        %p147 = pneg %p146
      $region22: #{tpu_custom_call.1} parent=5 // pred_check_branch
        %149 = sbr.rel (%p147) target = $region24
      $region23: #{tpu_custom_call.1} parent=5 // pred_region
        // Predicated region
        $region25: #{tpu_custom_call.1} parent=23 // pred_check
          %p150 = pneg %p49
        $region26: #{tpu_custom_call.1} parent=23 // pred_check_branch
          %152 = sbr.rel (%p150) target = $region28
        $region27: #{tpu_custom_call.1} parent=23 // pred_region
          %s153 = sand.u32 %s39, 1
          %s154 = scalar_lea.sflag [#allocation3], %s153
          %s155 = sand.u32 %s39, 1
          %s156 = smul.addr %s155, 128
          %s157 = scalar_lea.vmem [#allocation2], %s156
          %s158 = smul.u32 2, %s23
          %160 = vsyncadd %s154, 0
          %s161 = smul.addr %s22, 16
          %s162 = sadd.s32 %s158, %s161
          %s163 = smul.addr %s162, 8
          %s164 = scalar_lea.hbm %s0, %s163
          %s165 = sshll.u32 %s164, 4
          %s166 = int_to_ptr.hbm [resolvable:$true] %s165
          %s167 = sshll.u32 %s157, 4
          %s168 = int_to_ptr.vmem [resolvable:$true] %s167
          %173 = dma.hbm_to_vmem [thread:$0]  %s166, 2048, %s168, %s154, 256, 256, 16
        $region28: #{tpu_custom_call.1} parent=23 // pred_fallthru
          _
      $region24: #{tpu_custom_call.1} parent=5 // pred_fallthru
        _
      %p174 = scmp.le.s32.totalorder 1, %s15
      %p175 = scmp.lt.s32.totalorder %s15, 3
      %p176 = pnand %p174, %p175
      %p177 = pneg %p176
      // Predicated region
      $region29: #{tpu_custom_call.1} parent=5 // pred_check
        _
      $region30: #{tpu_custom_call.1} parent=5 // pred_check_branch
        %179 = sbr.rel (%p176) target = $region32
      $region31: #{tpu_custom_call.1} parent=5 // pred_region
        %s180 = ssub.s32 %s15, 1
        %s181 = sand.u32 %s42, 1
        %s182 = scalar_lea.sflag [#allocation3], %s181
        %s183 = sand.u32 %s42, 1
        %s184 = smul.addr %s183, 128
        %s185 = scalar_lea.vmem [#allocation2], %s184
        // Predicated region
        $region33: #{tpu_custom_call.1} parent=31 // pred_check
          %p186 = pneg %p55
        $region34: #{tpu_custom_call.1} parent=31 // pred_check_branch
          %188 = sbr.rel (%p186) target = $region36
        $region35: #{tpu_custom_call.1} parent=31 // pred_region
          %190 = dma.done %s182, 2048
        $region36: #{tpu_custom_call.1} parent=31 // pred_fallthru
          _
        %s191 = sand.u32 %s42, 1
        %s192 = scalar_lea.sflag [#allocation3], %s191
        %s193 = sand.u32 %s42, 1
        %s194 = smul.addr %s193, 128
        %s195 = scalar_lea.vmem [#allocation2], %s194
        %p196 = pneg %p55
        %p197 = pneg %p52
        %p198 = pneg %p76
        %p199 = pneg %p73
        %p200 = pneg %p97
        %p201 = pneg %p94
        %p202 = pneg %p125
        %p203 = pneg %p122
        %s204 = sand.u32 %s112, 1
        %s205 = scalar_lea.sflag [#allocation4], %s204
        %s206 = sand.u32 %s112, 1
        %s207 = smul.addr %s206, 32
        %s208 = scalar_lea.vmem [#allocation5], %s207
        %s209 = smul.u32 2, %s25
        %s210 = smul.u32 2, %s25
        %v212 = vld [vmem:[%s185] sm:$0xff]
        %v213 = vld [vmem:[%s185 + $0x8] sm:$0xff]
        %v214 = vld [vmem:[%s185 + $0x10] sm:$0xff]
        %v215 = vld [vmem:[%s185 + $0x18] sm:$0xff]
        %v216 = vld [vmem:[%s185 + $0x20] sm:$0xff]
        %v217 = vld [vmem:[%s185 + $0x28] sm:$0xff]
        %v218 = vld [vmem:[%s185 + $0x30] sm:$0xff]
        %v219 = vld [vmem:[%s185 + $0x38] sm:$0xff]
        %v220 = vld [vmem:[%s185 + $0x40] sm:$0xff]
        %v221 = vld [vmem:[%s185 + $0x48] sm:$0xff]
        %v222 = vld [vmem:[%s185 + $0x50] sm:$0xff]
        %v223 = vld [vmem:[%s185 + $0x58] sm:$0xff]
        %v224 = vld [vmem:[%s185 + $0x60] sm:$0xff]
        %v225 = vld [vmem:[%s185 + $0x68] sm:$0xff]
        %v226 = vld [vmem:[%s185 + $0x70] sm:$0xff]
        %v227 = vld [vmem:[%s185 + $0x78] sm:$0xff]
        %v228 = vpack.c.bf16 %v214, %v212
        %v229 = vpack.c.bf16 %v215, %v213
        %v230 = vpack.c.bf16 %v218, %v216
        %v231 = vpack.c.bf16 %v219, %v217
        %v232 = vpack.c.bf16 %v222, %v220
        %v233 = vpack.c.bf16 %v223, %v221
        %v234 = vpack.c.bf16 %v226, %v224
        %v235 = vpack.c.bf16 %v227, %v225
        %v236 = vld [vmem:[%s1] sm:$0xf]
        %v237 = vld [vmem:[%s1 + $0x4] sm:$0xf]
        %v238 = vld [vmem:[%s1 + $0x8] sm:$0xf]
        %v239 = vld [vmem:[%s1 + $0xc] sm:$0xf]
        %v240 = vld [vmem:[%s2] sm:$0xff]
        %v241 = vld [vmem:[%s2 + $0x8] sm:$0xff]
        %v242 = vld [vmem:[%s2 + $0x10] sm:$0xff]
        %v243 = vld [vmem:[%s2 + $0x18] sm:$0xff]
        %245 = vset.pattern.permute.xlu0 0
        %246 = vperm.xlu0 %245, %v240
        %v247 = vpop.permute.xlu0 %246
        %250 = vset.pattern.permute.xlu0 0
        %251 = vperm.xlu0 %250, %v241
        %v252 = vpop.permute.xlu0 %251
        %255 = vset.pattern.permute.xlu0 0
        %256 = vperm.xlu0 %255, %v242
        %v257 = vpop.permute.xlu0 %256
        %260 = vset.pattern.permute.xlu0 0
        %261 = vperm.xlu0 %260, %v243
        %v262 = vpop.permute.xlu0 %261
        %v268 = vunpack.c.l.b16 %v236
        %v269 = vunpack.c.l.b16 %v237
        %v270 = vunpack.c.l.b16 %v238
        %v271 = vunpack.c.l.b16 %v239
        %v272 = vpack.c.b16 %v269, %v268
        %v273 = vpack.c.b16 %v271, %v270
        %vm274 = vcmask 523264
        %v276 = vsel %vm274, %v272, 0
        %v279 = vsel %vm274, %v273, 0
        %281 = vmatpush.bf16.msra.mxu0 0
        %282 = vmatpush.bf16.msra.mxu0 0
        %283 = vmatpush.bf16.msra.mxu0 0
        %284 = vmatpush.bf16.msra.mxu0 0
        %285 = vmatpush.bf16.msra.mxu0 %v234
        %286 = vmatpush.bf16.msra.mxu0 %v232
        %287 = vmatpush.bf16.msra.mxu0 %v230
        %288 = vmatpush.bf16.msra.mxu0 %v228
        %289 = vmatmul.bf16.gmra.mxu0 %v276
        %v290 = vpop.f32.mrf.mxu0
        %v291 = vadd.f32 %v247, %v290
        %v292 = vpop.f32.mrf.mxu0
        %v293 = vadd.f32 %v252, %v292
        %294 = vmatmul.bf16.gmra.mxu0 %v279
        %v295 = vpop.f32.mrf.mxu0
        %v296 = vadd.f32 %v257, %v295
        %v297 = vpop.f32.mrf.mxu0
        %v298 = vadd.f32 %v262, %v297
        %299 = vdwg.mxu0
        %300 = vmatpush.bf16.msra.mxu0 0
        %301 = vmatpush.bf16.msra.mxu0 0
        %302 = vmatpush.bf16.msra.mxu0 0
        %303 = vmatpush.bf16.msra.mxu0 0
        %304 = vmatpush.bf16.msra.mxu0 %v235
        %305 = vmatpush.bf16.msra.mxu0 %v233
        %306 = vmatpush.bf16.msra.mxu0 %v231
        %307 = vmatpush.bf16.msra.mxu0 %v229
        %308 = vmatmul.bf16.gmra.mxu0 %v276
        %v309 = vpop.f32.mrf.mxu0
        %v310 = vadd.f32 %v247, %v309
        %v311 = vpop.f32.mrf.mxu0
        %v312 = vadd.f32 %v252, %v311
        %313 = vmatmul.bf16.gmra.mxu0 %v279
        %v314 = vpop.f32.mrf.mxu0
        %v315 = vadd.f32 %v257, %v314
        %v316 = vpop.f32.mrf.mxu0
        %v317 = vadd.f32 %v262, %v316
        %318 = vdwg.mxu0
        %v319 = vmax.f32 %v291, 0.0
        %v320 = vmax.f32 %v310, 0.0
        %v321 = vmax.f32 %v293, 0.0
        %v322 = vmax.f32 %v312, 0.0
        %v323 = vmax.f32 %v296, 0.0
        %v324 = vmax.f32 %v315, 0.0
        %v325 = vmax.f32 %v298, 0.0
        %v326 = vmax.f32 %v317, 0.0
        %v327 = vpack.c.bf16 %v320, %v319
        %v328 = vpack.c.bf16 %v322, %v321
        %v329 = vpack.c.bf16 %v324, %v323
        %v330 = vpack.c.bf16 %v326, %v325
        %331 = vst [vmem:[%s208] sm:$0xff] %v327
        %332 = vst [vmem:[%s208 + $0x8] sm:$0xff] %v328
        %333 = vst [vmem:[%s208 + $0x10] sm:$0xff] %v329
        %334 = vst [vmem:[%s208 + $0x18] sm:$0xff] %v330
        %s335 = sand.u32 %s112, 1
        %s336 = scalar_lea.sflag [#allocation4], %s335
        %s337 = sand.u32 %s112, 1
        %s338 = smul.addr %s337, 32
        %s339 = scalar_lea.vmem [#allocation5], %s338
        // Predicated region
        $region37: #{tpu_custom_call.1} parent=31 // pred_check
          %p340 = pneg %p122
        $region38: #{tpu_custom_call.1} parent=31 // pred_check_branch
          %342 = sbr.rel (%p340) target = $region40
        $region39: #{tpu_custom_call.1} parent=31 // pred_region
          %s343 = smul.u32 2, %s25
          %345 = vsyncadd %s336, 0
          %s346 = smul.addr %s24, 8
          %s347 = sadd.s32 %s343, %s346
          %s348 = smul.addr %s347, 4
          %s349 = scalar_lea.hbm %s3, %s348
          %s350 = sshll.u32 %s339, 4
          %s351 = int_to_ptr.vmem [resolvable:$true] %s350
          %s352 = sshll.u32 %s349, 4
          %s353 = int_to_ptr.hbm [resolvable:$true] %s352
          %358 = dma.vmem_to_hbm [thread:$0]  %s351, 512, %s353, %s336, 128, 128, 8
        $region40: #{tpu_custom_call.1} parent=31 // pred_fallthru
          _
      $region32: #{tpu_custom_call.1} parent=5 // pred_fallthru
        _
      %p359 = scmp.le.s32.totalorder 2, %s15
      // Predicated region
      $region41: #{tpu_custom_call.1} parent=5 // pred_check
        %p360 = pneg %p359
      $region42: #{tpu_custom_call.1} parent=5 // pred_check_branch
        %362 = sbr.rel (%p360) target = $region44
      $region43: #{tpu_custom_call.1} parent=5 // pred_region
        %s363 = ssub.s32 %s15, 2
        // Predicated region
        $region45: #{tpu_custom_call.1} parent=43 // pred_check
          %p364 = pneg %p128
        $region46: #{tpu_custom_call.1} parent=43 // pred_check_branch
          %366 = sbr.rel (%p364) target = $region48
        $region47: #{tpu_custom_call.1} parent=43 // pred_region
          %s367 = sand.u32 %s113, 1
          %s368 = scalar_lea.sflag [#allocation4], %s367
          %s369 = sand.u32 %s113, 1
          %s370 = smul.addr %s369, 32
          %s371 = scalar_lea.vmem [#allocation5], %s370
          %373 = dma.done %s368, 512
        $region48: #{tpu_custom_call.1} parent=43 // pred_fallthru
          _
      $region44: #{tpu_custom_call.1} parent=5 // pred_fallthru
        _
    $region6: #{tpu_custom_call.1} parent=1 // loop_footer
      %s19 = sadd.s32 1, %s15
    $region7: #{tpu_custom_call.1} parent=1 // loop_footer_branch
      %14 = sbr.rel target = $region3
    $region8: #{tpu_custom_call.1} parent=1 // loop_exit
      _
    %374 = vsyncpa [#allocation3], 1
    %s375 = scalar_lea.sflag [#allocation3], 1
    %376 = vsyncpa %s375, 1
    %377 = vsyncpa [#allocation4], 1
    %s378 = scalar_lea.sflag [#allocation4], 1
    %379 = vsyncpa %s378, 1

</llo_original>
